<compile_context>
chip_gen: v7x
topology: tpu7x:2x2x1
jax: 0.10.0
libtpu: 0.0.40
codegen_flags: <defaults>
</compile_context>

<pallas_src>
import math

import jax
import jax.numpy as jnp
from jax.experimental import pallas as pl
from jax.experimental.pallas import tpu as pltpu


_MIB = 1024 * 1024
_VMEM_RESIDENT_BUDGET = 40 * _MIB   # full-weight-resident path must fit in this
_VMEM_LIMIT_BYTES = 48 * _MIB       # <= v7x's 64 MiB physical VMEM, fine on v5e/v6e


def _round_up(x, m):
    return ((x + m - 1) // m) * m


def _sublane_granule(dtype):
    # f32 -> 8, bf16 -> 16, int8/fp8 -> 32 sublanes per vreg tile.
    return max(8, 32 // jnp.dtype(dtype).itemsize)


def _sopl_kernel(x1_ref, prep_ref, ptile_ref, w_ref, o_ref):
    # x1_ref:    [TB, F+1]        input tile with the constant-1 column appended
    # prep_ref:  [F+1, (F+1)^2]   constant 0/1 "repeat" matrix (selects x1[:, k // (F+1)])
    # ptile_ref: [F+1, (F+1)^2]   constant 0/1 "tile"   matrix (selects x1[:, k %  (F+1)])
    # w_ref:     [(F+1)^2, TO]    W_torch.T (padded), bias folded into the last row
    # o_ref:     [TB, TO]
    x1 = x1_ref[...]
    # Flattened self outer product via two MXU matmuls (exact 0/1 selections)
    # followed by one lane-dense VPU multiply.  No misaligned lane concats.
    left = jnp.dot(x1, prep_ref[...])     # [TB, K]  == x1[:, k // (F+1)]
    right = jnp.dot(x1, ptile_ref[...])   # [TB, K]  == x1[:, k %  (F+1)]
    xx = left * right                     # xx[b, i*(F+1)+j] = x1[b,i] * x1[b,j]
    # Single MXU matmul over the full K = (F+1)^2 with f32 accumulation.  The
    # bias rides w_ref's last row since xx[:, K-1] == 1 for every real row.
    acc = jnp.dot(xx, w_ref[...], preferred_element_type=jnp.float32)
    o_ref[...] = acc.astype(o_ref.dtype)


def prepare_sopl_params(weight, bias=None):
    """One-time re-layout of the PyTorch nn.Linear parameters (NOT per call).

    weight: [out, (F+1)^2] -> transposed & padded to [(F+1)^2, out_p]
            (out padded to a 128 multiple), bias folded into the last row.
    Also builds the constant 0/1 repeat/tile matrices used to construct the
    flattened outer product on the MXU.  Returns (w2, p_rep, p_tile).
    """
    out_features, k = weight.shape
    f1 = math.isqrt(k)
    assert f1 * f1 == k, "weight fan-in must be (in_features + 1)^2"
    dtype = weight.dtype

    out_p = _round_up(out_features, 128)
    w2 = jnp.zeros((k, out_p), dtype).at[:, :out_features].set(weight.T)
    if bias is not None:
        # xx[:, k-1] == 1*1 == 1, so the bias is folded into the last weight row.
        w2 = w2.at[k - 1, :out_features].add(bias.astype(dtype))

    cols = jnp.arange(k)
    rows = jnp.arange(f1)
    p_rep = (rows[:, None] == (cols // f1)[None, :]).astype(dtype)   # [f1, k]
    p_tile = (rows[:, None] == (cols % f1)[None, :]).astype(dtype)   # [f1, k]
    return w2, p_rep, p_tile


def self_outer_product_linear(x, w2, p_rep, p_tile, out_features):
    """SelfOuterProductLinear forward (fused self-outer-product + linear).

    x:      [B, F]
    w2:     [(F+1)^2, out_p]   from prepare_sopl_params (bias folded in)
    p_rep:  [F+1, (F+1)^2]
    p_tile: [F+1, (F+1)^2]
    returns [B, out_features]
    """
    B, F = x.shape
    f1 = F + 1
    K = f1 * f1
    assert w2.shape[0] == K and p_rep.shape == (f1, K) and p_tile.shape == (f1, K)
    out_p = w2.shape[1]
    dtype = x.dtype
    isz = jnp.dtype(dtype).itemsize

    # Append the constant-1 column; pad batch to the (dtype-aware) tile size.
    granule = _sublane_granule(dtype)
    tb = min(256, _round_up(B, granule))
    b_pad = _round_up(B, tb)
    x1 = jnp.concatenate([x, jnp.ones((B, 1), dtype)], axis=1)     # [B, F+1]
    if b_pad != B:
        x1 = jnp.pad(x1, ((0, b_pad - B), (0, 0)))  # zero rows -> zero outputs, sliced off

    # VMEM estimate for the "whole weight resident, no out tiling" main path:
    # weight (single-buffered: constant index_map) + constant matrices +
    # double-buffered x1 and output tiles + f32 intermediates.
    resident_bytes = (
        K * out_p * w2.dtype.itemsize
        + 2 * f1 * K * isz
        + 2 * tb * f1 * isz
        + 2 * tb * out_p * isz
        + 3 * tb * K * 4
    )

    if resident_bytes <= _VMEM_RESIDENT_BUDGET:
        # Main path: grid over batch tiles only.  Weight / constant matrices have
        # constant index_maps -> DMA'd from HBM once, then stay resident.
        # xx is built exactly once per batch tile (no out-tile loop).
        grid = (b_pad // tb,)
        in_specs = [
            pl.BlockSpec((tb, f1), lambda bi: (bi, 0)),
            pl.BlockSpec((f1, K), lambda bi: (0, 0)),
            pl.BlockSpec((f1, K), lambda bi: (0, 0)),
            pl.BlockSpec((K, out_p), lambda bi: (0, 0)),
        ]
        out_specs = pl.BlockSpec((tb, out_p), lambda bi: (bi, 0))
        dims = ("parallel",)
        to = out_p
        x_reads = 1
    else:
        # Fallback for very large out_features: tile the OUT dim, with the OUT
        # axis as the OUTER grid axis (batch innermost) so each weight tile's
        # block index is constant across the inner batch loop and the weight is
        # still streamed from HBM exactly once in total.
        to = 512                                   # 256-multiple: full MXU columns on v6e/v7x
        out_pp = _round_up(out_p, to)
        if out_pp != out_p:
            w2 = jnp.pad(w2, ((0, 0), (0, out_pp - out_p)))
            out_p = out_pp
        grid = (out_p // to, b_pad // tb)
        in_specs = [
            pl.BlockSpec((tb, f1), lambda oi, bi: (bi, 0)),
            pl.BlockSpec((f1, K), lambda oi, bi: (0, 0)),
            pl.BlockSpec((f1, K), lambda oi, bi: (0, 0)),
            pl.BlockSpec((K, to), lambda oi, bi: (0, oi)),
        ]
        out_specs = pl.BlockSpec((tb, to), lambda oi, bi: (bi, oi))
        dims = ("parallel", "parallel")
        x_reads = out_p // to

    # Honest cost estimate (weight is read once in both schedules).
    flops = 2 * b_pad * K * out_p + 2 * (2 * b_pad * f1 * K) + b_pad * K
    bytes_accessed = (
        x_reads * b_pad * f1 * isz
        + 2 * f1 * K * isz
        + K * out_p * w2.dtype.itemsize
        + b_pad * out_p * isz
    )

    out = pl.pallas_call(
        _sopl_kernel,
        out_shape=jax.ShapeDtypeStruct((b_pad, out_p), dtype),
        grid=grid,
        in_specs=in_specs,
        out_specs=out_specs,
        compiler_params=pltpu.CompilerParams(
            dimension_semantics=dims,
            vmem_limit_bytes=_VMEM_LIMIT_BYTES,
        ),
        cost_estimate=pl.CostEstimate(
            flops=flops, transcendentals=0, bytes_accessed=bytes_accessed),
    )(x1, p_rep, p_tile, w2)
    return out[:B, :out_features]


def _reference(x, weight, bias):
    # Pure-JAX port of OuterProductLinear.forward(x, x) with ptu.double_moments.
    B, _ = x.shape
    x1 = jnp.concatenate([x, jnp.ones((B, 1), x.dtype)], axis=1)
    outer_flat = (x1[:, :, None] * x1[:, None, :]).reshape(B, -1)
    y = outer_flat @ weight.T
    if bias is not None:
        y = y + bias
    return y


if __name__ == "__main__":
    key = jax.random.PRNGKey(0)
    k_x, k_w, k_b = jax.random.split(key, 3)

    B, in_features, out_features = 2, 8, 16
    fan_in = (in_features + 1) ** 2  # nn.Linear((F+1)*(F+1), out)

    x = jax.random.normal(k_x, (B, in_features), dtype=jnp.float32)
    bound = 1.0 / (fan_in ** 0.5)    # PyTorch-Linear-style uniform init, deterministic
    weight = jax.random.uniform(k_w, (out_features, fan_in), jnp.float32, -bound, bound)
    bias = jax.random.uniform(k_b, (out_features,), jnp.float32, -bound, bound)

    # One-time parameter re-layout (kept out of the per-call path).
    w2, p_rep, p_tile = prepare_sopl_params(weight, bias)

    y = self_outer_product_linear(x, w2, p_rep, p_tile, out_features)
    y = jax.block_until_ready(y)

    y_ref = _reference(x, weight, bias)
    assert y.shape == (B, out_features)
    assert jnp.allclose(y, y_ref, atol=1e-5, rtol=1e-5), "Pallas kernel mismatch vs reference"
    print("KERNEL_OK")
</pallas_src>

<mosaic_0001>
module attributes {stable_mosaic.version = 11 : i64} {
  func.func @_sopl_kernel(%arg0: i32, %arg1: memref<8x9xf32, #tpu.memory_space<vmem>>, %arg2: memref<9x81xf32, #tpu.memory_space<vmem>>, %arg3: memref<9x81xf32, #tpu.memory_space<vmem>>, %arg4: memref<81x128xf32, #tpu.memory_space<vmem>>, %arg5: memref<8x128xf32, #tpu.memory_space<vmem>>) attributes {dimension_semantics = [#tpu.dimension_semantics<parallel>], iteration_bounds = array<i64: 1>, scalar_prefetch = 0 : i64, scratch_operands = 0 : i64, tpu.core_type = #tpu.core_type<tc>, window_params = [{transform_indices = @transform_0, window_bounds = array<i64: 8, 9>}, {pipeline_mode = #tpu.pipeline_mode<synchronous>, transform_indices = @transform_1, window_bounds = array<i64: 9, 81>}, {pipeline_mode = #tpu.pipeline_mode<synchronous>, transform_indices = @transform_2, window_bounds = array<i64: 9, 81>}, {pipeline_mode = #tpu.pipeline_mode<synchronous>, transform_indices = @transform_3, window_bounds = array<i64: 81, 128>}, {transform_indices = @transform_4, window_bounds = array<i64: 8, 128>}]} {
    %c0 = arith.constant 0 : index
    %c0_0 = arith.constant 0 : index
    %0 = vector.load %arg1[%c0, %c0_0] : memref<8x9xf32, #tpu.memory_space<vmem>>, vector<8x9xf32>
    %c0_1 = arith.constant 0 : index
    %c0_2 = arith.constant 0 : index
    %1 = vector.load %arg2[%c0_1, %c0_2] : memref<9x81xf32, #tpu.memory_space<vmem>>, vector<9x81xf32>
    %cst = arith.constant dense<0.000000e+00> : vector<8x81xf32>
    %2 = tpu.matmul %0, %1, %cst {dimension_numbers = #tpu.dot_dimension_numbers<[1], [0], [0], [1], [0, 0, 1, 1], [], []>} : vector<8x9xf32>, vector<9x81xf32>, vector<8x81xf32> -> vector<8x81xf32>
    %c0_3 = arith.constant 0 : index
    %c0_4 = arith.constant 0 : index
    %3 = vector.load %arg3[%c0_3, %c0_4] : memref<9x81xf32, #tpu.memory_space<vmem>>, vector<9x81xf32>
    %cst_5 = arith.constant dense<0.000000e+00> : vector<8x81xf32>
    %4 = tpu.matmul %0, %3, %cst_5 {dimension_numbers = #tpu.dot_dimension_numbers<[1], [0], [0], [1], [0, 0, 1, 1], [], []>} : vector<8x9xf32>, vector<9x81xf32>, vector<8x81xf32> -> vector<8x81xf32>
    %5 = arith.mulf %2, %4 : vector<8x81xf32>
    %c0_6 = arith.constant 0 : index
    %c0_7 = arith.constant 0 : index
    %6 = vector.load %arg4[%c0_6, %c0_7] : memref<81x128xf32, #tpu.memory_space<vmem>>, vector<81x128xf32>
    %cst_8 = arith.constant dense<0.000000e+00> : vector<8x128xf32>
    %7 = tpu.matmul %5, %6, %cst_8 {dimension_numbers = #tpu.dot_dimension_numbers<[1], [0], [0], [1], [0, 0, 1, 1], [], []>} : vector<8x81xf32>, vector<81x128xf32>, vector<8x128xf32> -> vector<8x128xf32>
    %c0_9 = arith.constant 0 : index
    %c0_10 = arith.constant 0 : index
    %8 = vector.load %arg5[%c0_9, %c0_10] : memref<8x128xf32, #tpu.memory_space<vmem>>, vector<8x128xf32>
    tpu.vector_store %arg5[%c0_9, %c0_10], %7 {strides = array<i32>} : memref<8x128xf32, #tpu.memory_space<vmem>>, vector<8x128xf32>,
    return
  }
  func.func @transform_0(%arg0: i32) -> (i32, i32) {
    %c0_i32 = arith.constant 0 : i32
    %c0_i32_0 = arith.constant 0 : i32
    return %arg0, %c0_i32 : i32, i32
  }
  func.func @transform_1(%arg0: i32) -> (i32, i32) {
    %c0_i32 = arith.constant 0 : i32
    %c0_i32_0 = arith.constant 0 : i32
    %c0_i32_1 = arith.constant 0 : i32
    return %c0_i32, %c0_i32_0 : i32, i32
  }
  func.func @transform_2(%arg0: i32) -> (i32, i32) {
    %c0_i32 = arith.constant 0 : i32
    %c0_i32_0 = arith.constant 0 : i32
    %c0_i32_1 = arith.constant 0 : i32
    return %c0_i32, %c0_i32_0 : i32, i32
  }
  func.func @transform_3(%arg0: i32) -> (i32, i32) {
    %c0_i32 = arith.constant 0 : i32
    %c0_i32_0 = arith.constant 0 : i32
    %c0_i32_1 = arith.constant 0 : i32
    return %c0_i32, %c0_i32_0 : i32, i32
  }
  func.func @transform_4(%arg0: i32) -> (i32, i32) {
    %c0_i32 = arith.constant 0 : i32
    %c0_i32_0 = arith.constant 0 : i32
    return %arg0, %c0_i32 : i32, i32
  }
}

</mosaic_0001>

<llo_original>
// kernel: tpu_custom_call.1
$region0: #{tpu_custom_call.1}
  #allocation0 [shape = 'u32[]', space=smem, size = 0x4, offset = 0x4, fixed_abs, tag = 'smem constant byte address 0x4 - core index']
  #allocation1 [shape = 'u32[144,128]{1,0:T(1,128)}', space=vmem, size = 0x12000, scoped, tag = 'internal scratch']
  %s0 = inlined_call_operand.hbm [shape: f32[8,9], index: 0, kind: input, shape index: {}]
  %s1 = inlined_call_operand.hbm [shape: f32[9,81], index: 1, kind: input, shape index: {}]
  %s2 = inlined_call_operand.hbm [shape: f32[9,81], index: 2, kind: input, shape index: {}]
  %s3 = inlined_call_operand.hbm [shape: f32[81,128], index: 3, kind: input, shape index: {}]
  %s4 = inlined_call_operand.hbm [shape: f32[8,128], index: 4, kind: output, shape index: {}]
  %s5 = sld [smem:[#allocation0]]
  $region42: #{tpu_custom_call.1} parent=0
    _
  %s7 = ssub.s32 1, %s5
  %s8 = scalar_select 0, %s7, %s5
  $region1: #{tpu_custom_call.1} parent=0
    #allocation2 [shape = 'u8[4096]{0}', space=vmem, size = 0x1000, scoped, tag = 'input window, operand 0, single buffered']
    #allocation3 [shape = 's32[1]{0}', space=sflag, size = 0x4, scoped, tag = 'scoped memory for tpu_custom_call.1']
    #allocation4 [shape = 's32[1]{0}', space=sflag, size = 0x4, scoped, tag = 'scoped memory for tpu_custom_call.1']
    #allocation5 [shape = 'u8[8192]{0}', space=vmem, size = 0x2000, scoped, tag = 'input window, operand 1, single buffered']
    #allocation6 [shape = 's32[1]{0}', space=sflag, size = 0x4, scoped, tag = 'scoped memory for tpu_custom_call.1']
    #allocation7 [shape = 'u8[8192]{0}', space=vmem, size = 0x2000, scoped, tag = 'input window, operand 2, single buffered']
    #allocation8 [shape = 'u8[45056]{0}', space=vmem, size = 0xb000, scoped, tag = 'input window, operand 3, single buffered']
    #allocation9 [shape = 's32[1]{0}', space=sflag, size = 0x4, scoped, tag = 'scoped memory for tpu_custom_call.1']
    #allocation10 [shape = 'u8[4096]{0}', space=vmem, size = 0x1000, scoped, tag = 'output window, operand 0, single buffered']
    %9 = vsyncpa [#allocation3], 0
    %10 = vsyncpa [#allocation6], 0
    %11 = vsyncpa [#allocation9], 0
    %12 = vsyncpa [#allocation4], 0
    // Predicated region
    $region2: #{tpu_custom_call.1} parent=1 // pred_check
      _
    $region3: #{tpu_custom_call.1} parent=1 // pred_check_branch
      %14 = sbr.rel (0) target = $region5
    $region4: #{tpu_custom_call.1} parent=1 // pred_region
      %s16 = ssub.s32 128, 128
      %17 = vsyncadd [#allocation3], %s16
      %s19 = sshll.u32 [#allocation2], 4
      %s20 = int_to_ptr.vmem [resolvable:$true] %s19
      %22 = dma.hbm_to_vmem [thread:$0]  %s0, 128, %s20, [#allocation3]
    $region5: #{tpu_custom_call.1} parent=1 // pred_fallthru
      _
    // Predicated region
    $region6: #{tpu_custom_call.1} parent=1 // pred_check
      _
    $region7: #{tpu_custom_call.1} parent=1 // pred_check_branch
      %24 = sbr.rel (0) target = $region9
    $region8: #{tpu_custom_call.1} parent=1 // pred_region
      %s26 = ssub.s32 256, 256
      %27 = vsyncadd [#allocation6], %s26
      %s28 = sshll.u32 [#allocation5], 4
      %s29 = int_to_ptr.vmem [resolvable:$true] %s28
      %34 = dma.hbm_to_vmem [thread:$0]  %s1, 256, %s29, [#allocation6], 128, 128, 8
    $region9: #{tpu_custom_call.1} parent=1 // pred_fallthru
      _
    // Predicated region
    $region10: #{tpu_custom_call.1} parent=1 // pred_check
      _
    $region11: #{tpu_custom_call.1} parent=1 // pred_check_branch
      %36 = sbr.rel (0) target = $region13
    $region12: #{tpu_custom_call.1} parent=1 // pred_region
      %s38 = ssub.s32 256, 256
      %39 = vsyncadd [#allocation6], %s38
      %s40 = sshll.u32 [#allocation7], 4
      %s41 = int_to_ptr.vmem [resolvable:$true] %s40
      %46 = dma.hbm_to_vmem [thread:$0]  %s2, 256, %s41, [#allocation6], 128, 128, 8
    $region13: #{tpu_custom_call.1} parent=1 // pred_fallthru
      _
    // Predicated region
    $region14: #{tpu_custom_call.1} parent=1 // pred_check
      _
    $region15: #{tpu_custom_call.1} parent=1 // pred_check_branch
      %48 = sbr.rel (0) target = $region17
    $region16: #{tpu_custom_call.1} parent=1 // pred_region
      %s50 = ssub.s32 1408, 1408
      %51 = vsyncadd [#allocation9], %s50
      %s52 = sshll.u32 [#allocation8], 4
      %s53 = int_to_ptr.vmem [resolvable:$true] %s52
      %58 = dma.hbm_to_vmem [thread:$0]  %s3, 1408, %s53, [#allocation9], 128, 128, 8
    $region17: #{tpu_custom_call.1} parent=1 // pred_fallthru
      _
    // Predicated region
    $region18: #{tpu_custom_call.1} parent=1 // pred_check
      _
    $region19: #{tpu_custom_call.1} parent=1 // pred_check_branch
      %60 = sbr.rel (0) target = $region21
    $region20: #{tpu_custom_call.1} parent=1 // pred_region
      %61 = dma.done [#allocation3], 128
    $region21: #{tpu_custom_call.1} parent=1 // pred_fallthru
      _
    // Predicated region
    $region22: #{tpu_custom_call.1} parent=1 // pred_check
      _
    $region23: #{tpu_custom_call.1} parent=1 // pred_check_branch
      %63 = sbr.rel (0) target = $region25
    $region24: #{tpu_custom_call.1} parent=1 // pred_region
      %64 = dma.done [#allocation6], 256
    $region25: #{tpu_custom_call.1} parent=1 // pred_fallthru
      _
    // Predicated region
    $region26: #{tpu_custom_call.1} parent=1 // pred_check
      _
    $region27: #{tpu_custom_call.1} parent=1 // pred_check_branch
      %66 = sbr.rel (0) target = $region29
    $region28: #{tpu_custom_call.1} parent=1 // pred_region
      %67 = dma.done [#allocation6], 256
    $region29: #{tpu_custom_call.1} parent=1 // pred_fallthru
      _
    // Predicated region
    $region30: #{tpu_custom_call.1} parent=1 // pred_check
      _
    $region31: #{tpu_custom_call.1} parent=1 // pred_check_branch
      %69 = sbr.rel (0) target = $region33
    $region32: #{tpu_custom_call.1} parent=1 // pred_region
      %70 = dma.done [#allocation9], 1408
    $region33: #{tpu_custom_call.1} parent=1 // pred_fallthru
      _
    %v71 = vld [vmem:[#allocation2] sm:$0xff]
    %v72 = vld [vmem:[#allocation5] sm:$0xff]
    %v73 = vld [vmem:[#allocation5 + $0x8] sm:$0x1]
    %vm74 = vcmask 72704
    %v76 = vsel %vm74, %v71, 0
    %vm78 = vcmask 1040384
    %v80 = vsel %vm78, %v73, 0
    %82 = vmatprep.subr.mxu0 0.0
    %83 = vmatpush1.msra.mxu0 %v72
    %84 = vmatprep.subr.mxu0 0.0
    %85 = vmatpush1.msra.mxu0 %v80
    %86 = vmatprep.subr.mxu0 0.0
    %87 = vmatpush1.msra.mxu0 0.0
    %88 = vmatprep.subr.mxu0 0.0
    %89 = vmatpush1.msra.mxu0 0.0
    %90 = vmatprep.subr.mxu0 0.0
    %91 = vmatpush1.msra.mxu0 0.0
    %92 = vmatprep.subr.mxu0 0.0
    %93 = vmatpush1.msra.mxu0 0.0
    %94 = vmatprep.subr.mxu0 0.0
    %95 = vmatpush1.msra.mxu0 0.0
    %96 = vmatprep.subr.mxu0 0.0
    %97 = vmatpush1.msra.mxu0 0.0
    %98 = vmatprep.subr.mxu0 0.0
    %99 = vmatpush1.msra.mxu0 0.0
    %100 = vmatprep.subr.mxu0 0.0
    %101 = vmatpush1.msra.mxu0 0.0
    %102 = vmatprep.subr.mxu0 0.0
    %103 = vmatpush1.msra.mxu0 0.0
    %104 = vmatprep.subr.mxu0 0.0
    %105 = vmatpush1.msra.mxu0 0.0
    %106 = vmatprep.subr.mxu0 0.0
    %107 = vmatpush1.msra.mxu0 0.0
    %108 = vmatprep.subr.mxu0 0.0
    %109 = vmatpush1.msra.mxu0 0.0
    %110 = vmatprep.subr.mxu0 0.0
    %111 = vmatpush1.msra.mxu0 0.0
    %112 = vmatprep.subr.mxu0 0.0
    %113 = vmatpush1.msra.mxu0 0.0
    %114 = vmatprep.subr.mxu0 0.0
    %115 = vmatpush1.msra.mxu0 0.0
    %116 = vmatprep.subr.mxu0 0.0
    %117 = vmatpush1.msra.mxu0 0.0
    %118 = vmatprep.subr.mxu0 0.0
    %119 = vmatpush1.msra.mxu0 0.0
    %120 = vmatprep.subr.mxu0 0.0
    %121 = vmatpush1.msra.mxu0 0.0
    %122 = vmatprep.subr.mxu0 0.0
    %123 = vmatpush1.msra.mxu0 0.0
    %124 = vmatprep.subr.mxu0 0.0
    %125 = vmatpush1.msra.mxu0 0.0
    %126 = vmatprep.subr.mxu0 0.0
    %127 = vmatpush1.msra.mxu0 0.0
    %128 = vmatprep.subr.mxu0 0.0
    %129 = vmatpush1.msra.mxu0 0.0
    %130 = vmatprep.subr.mxu0 0.0
    %131 = vmatpush1.msra.mxu0 0.0
    %132 = vmatprep.subr.mxu0 0.0
    %133 = vmatpush1.msra.mxu0 0.0
    %134 = vmatprep.subr.mxu0 0.0
    %135 = vmatpush1.msra.mxu0 0.0
    %136 = vmatprep.subr.mxu0 0.0
    %137 = vmatpush1.msra.mxu0 0.0
    %138 = vmatprep.subr.mxu0 0.0
    %139 = vmatpush1.msra.mxu0 0.0
    %140 = vmatprep.subr.mxu0 0.0
    %141 = vmatpush1.msra.mxu0 0.0
    %142 = vmatprep.subr.mxu0 0.0
    %143 = vmatpush1.msra.mxu0 0.0
    %144 = vmatprep.subr.mxu0 0.0
    %145 = vmatpush1.msra.mxu0 0.0
    %146 = vmatprep.mubr.f32.mxu0 0.0
    %147 = vmatmul.mubr.f32.gmra.mrb[0].mxu0 %v76
    %v148 = vpop.f32.mrb[0].mxu0
    %v149 = vadd.f32 0.0, %v148
    %v150 = vpop.f32.mrb[0].mxu0
    %151 = vdwg.mxu0
    %v152 = vld [vmem:[#allocation7] sm:$0xff]
    %v153 = vld [vmem:[#allocation7 + $0x8] sm:$0x1]
    %v155 = vsel %vm78, %v153, 0
    %157 = vmatprep.subr.mxu0 0.0
    %158 = vmatpush1.msra.mxu0 %v152
    %159 = vmatprep.subr.mxu0 0.0
    %160 = vmatpush1.msra.mxu0 %v155
    %161 = vmatprep.subr.mxu0 0.0
    %162 = vmatpush1.msra.mxu0 0.0
    %163 = vmatprep.subr.mxu0 0.0
    %164 = vmatpush1.msra.mxu0 0.0
    %165 = vmatprep.subr.mxu0 0.0
    %166 = vmatpush1.msra.mxu0 0.0
    %167 = vmatprep.subr.mxu0 0.0
    %168 = vmatpush1.msra.mxu0 0.0
    %169 = vmatprep.subr.mxu0 0.0
    %170 = vmatpush1.msra.mxu0 0.0
    %171 = vmatprep.subr.mxu0 0.0
    %172 = vmatpush1.msra.mxu0 0.0
    %173 = vmatprep.subr.mxu0 0.0
    %174 = vmatpush1.msra.mxu0 0.0
    %175 = vmatprep.subr.mxu0 0.0
    %176 = vmatpush1.msra.mxu0 0.0
    %177 = vmatprep.subr.mxu0 0.0
    %178 = vmatpush1.msra.mxu0 0.0
    %179 = vmatprep.subr.mxu0 0.0
    %180 = vmatpush1.msra.mxu0 0.0
    %181 = vmatprep.subr.mxu0 0.0
    %182 = vmatpush1.msra.mxu0 0.0
    %183 = vmatprep.subr.mxu0 0.0
    %184 = vmatpush1.msra.mxu0 0.0
    %185 = vmatprep.subr.mxu0 0.0
    %186 = vmatpush1.msra.mxu0 0.0
    %187 = vmatprep.subr.mxu0 0.0
    %188 = vmatpush1.msra.mxu0 0.0
    %189 = vmatprep.subr.mxu0 0.0
    %190 = vmatpush1.msra.mxu0 0.0
    %191 = vmatprep.subr.mxu0 0.0
    %192 = vmatpush1.msra.mxu0 0.0
    %193 = vmatprep.subr.mxu0 0.0
    %194 = vmatpush1.msra.mxu0 0.0
    %195 = vmatprep.subr.mxu0 0.0
    %196 = vmatpush1.msra.mxu0 0.0
    %197 = vmatprep.subr.mxu0 0.0
    %198 = vmatpush1.msra.mxu0 0.0
    %199 = vmatprep.subr.mxu0 0.0
    %200 = vmatpush1.msra.mxu0 0.0
    %201 = vmatprep.subr.mxu0 0.0
    %202 = vmatpush1.msra.mxu0 0.0
    %203 = vmatprep.subr.mxu0 0.0
    %204 = vmatpush1.msra.mxu0 0.0
    %205 = vmatprep.subr.mxu0 0.0
    %206 = vmatpush1.msra.mxu0 0.0
    %207 = vmatprep.subr.mxu0 0.0
    %208 = vmatpush1.msra.mxu0 0.0
    %209 = vmatprep.subr.mxu0 0.0
    %210 = vmatpush1.msra.mxu0 0.0
    %211 = vmatprep.subr.mxu0 0.0
    %212 = vmatpush1.msra.mxu0 0.0
    %213 = vmatprep.subr.mxu0 0.0
    %214 = vmatpush1.msra.mxu0 0.0
    %215 = vmatprep.subr.mxu0 0.0
    %216 = vmatpush1.msra.mxu0 0.0
    %217 = vmatprep.subr.mxu0 0.0
    %218 = vmatpush1.msra.mxu0 0.0
    %219 = vmatprep.subr.mxu0 0.0
    %220 = vmatpush1.msra.mxu0 0.0
    %221 = vmatprep.mubr.f32.mxu0 0.0
    %222 = vmatmul.mubr.f32.gmra.mrb[0].mxu0 %v76
    %v223 = vpop.f32.mrb[0].mxu0
    %v224 = vadd.f32 0.0, %v223
    %v225 = vpop.f32.mrb[0].mxu0
    %226 = vdwg.mxu0
    %v227 = vmul.f32 %v149, %v224
    %v228 = vld [vmem:[#allocation8] sm:$0xff]
    %v229 = vld [vmem:[#allocation8 + $0x8] sm:$0xff]
    %v230 = vld [vmem:[#allocation8 + $0x10] sm:$0xff]
    %v231 = vld [vmem:[#allocation8 + $0x18] sm:$0xff]
    %v232 = vld [vmem:[#allocation8 + $0x20] sm:$0xff]
    %v233 = vld [vmem:[#allocation8 + $0x28] sm:$0xff]
    %v234 = vld [vmem:[#allocation8 + $0x30] sm:$0xff]
    %v235 = vld [vmem:[#allocation8 + $0x38] sm:$0xff]
    %v236 = vld [vmem:[#allocation8 + $0x40] sm:$0xff]
    %v237 = vld [vmem:[#allocation8 + $0x48] sm:$0xff]
    %v238 = vld [vmem:[#allocation8 + $0x50] sm:$0x1]
    %vm239 = vcmask 662528
    %v241 = vsel %vm239, %v227, 0
    %v244 = vsel %vm78, %v238, 0
    %246 = vmatprep.subr.mxu0 0.0
    %247 = vmatpush1.msra.mxu0 %v228
    %248 = vmatprep.subr.mxu0 0.0
    %249 = vmatpush1.msra.mxu0 %v229
    %250 = vmatprep.subr.mxu0 0.0
    %251 = vmatpush1.msra.mxu0 %v230
    %252 = vmatprep.subr.mxu0 0.0
    %253 = vmatpush1.msra.mxu0 %v231
    %254 = vmatprep.subr.mxu0 0.0
    %255 = vmatpush1.msra.mxu0 %v232
    %256 = vmatprep.subr.mxu0 0.0
    %257 = vmatpush1.msra.mxu0 %v233
    %258 = vmatprep.subr.mxu0 0.0
    %259 = vmatpush1.msra.mxu0 %v234
    %260 = vmatprep.subr.mxu0 0.0
    %261 = vmatpush1.msra.mxu0 %v235
    %262 = vmatprep.subr.mxu0 0.0
    %263 = vmatpush1.msra.mxu0 %v236
    %264 = vmatprep.subr.mxu0 0.0
    %265 = vmatpush1.msra.mxu0 %v237
    %266 = vmatprep.subr.mxu0 0.0
    %267 = vmatpush1.msra.mxu0 %v244
    %268 = vmatprep.subr.mxu0 0.0
    %269 = vmatpush1.msra.mxu0 0.0
    %270 = vmatprep.subr.mxu0 0.0
    %271 = vmatpush1.msra.mxu0 0.0
    %272 = vmatprep.subr.mxu0 0.0
    %273 = vmatpush1.msra.mxu0 0.0
    %274 = vmatprep.subr.mxu0 0.0
    %275 = vmatpush1.msra.mxu0 0.0
    %276 = vmatprep.subr.mxu0 0.0
    %277 = vmatpush1.msra.mxu0 0.0
    %278 = vmatprep.subr.mxu0 0.0
    %279 = vmatpush1.msra.mxu0 0.0
    %280 = vmatprep.subr.mxu0 0.0
    %281 = vmatpush1.msra.mxu0 0.0
    %282 = vmatprep.subr.mxu0 0.0
    %283 = vmatpush1.msra.mxu0 0.0
    %284 = vmatprep.subr.mxu0 0.0
    %285 = vmatpush1.msra.mxu0 0.0
    %286 = vmatprep.subr.mxu0 0.0
    %287 = vmatpush1.msra.mxu0 0.0
    %288 = vmatprep.subr.mxu0 0.0
    %289 = vmatpush1.msra.mxu0 0.0
    %290 = vmatprep.subr.mxu0 0.0
    %291 = vmatpush1.msra.mxu0 0.0
    %292 = vmatprep.subr.mxu0 0.0
    %293 = vmatpush1.msra.mxu0 0.0
    %294 = vmatprep.subr.mxu0 0.0
    %295 = vmatpush1.msra.mxu0 0.0
    %296 = vmatprep.subr.mxu0 0.0
    %297 = vmatpush1.msra.mxu0 0.0
    %298 = vmatprep.subr.mxu0 0.0
    %299 = vmatpush1.msra.mxu0 0.0
    %300 = vmatprep.subr.mxu0 0.0
    %301 = vmatpush1.msra.mxu0 0.0
    %302 = vmatprep.subr.mxu0 0.0
    %303 = vmatpush1.msra.mxu0 0.0
    %304 = vmatprep.subr.mxu0 0.0
    %305 = vmatpush1.msra.mxu0 0.0
    %306 = vmatprep.subr.mxu0 0.0
    %307 = vmatpush1.msra.mxu0 0.0
    %308 = vmatprep.subr.mxu0 0.0
    %309 = vmatpush1.msra.mxu0 0.0
    %310 = vmatprep.mubr.f32.mxu0 0.0
    %311 = vmatmul.mubr.f32.gmra.mrb[0].mxu0 %v241
    %v312 = vpop.f32.mrb[0].mxu0
    %v313 = vadd.f32 0.0, %v312
    %v314 = vpop.f32.mrb[0].mxu0
    %315 = vdwg.mxu0
    %316 = vst [vmem:[#allocation10] sm:$0xff] %v313
    // Predicated region
    $region34: #{tpu_custom_call.1} parent=1 // pred_check
      _
    $region35: #{tpu_custom_call.1} parent=1 // pred_check_branch
      %318 = sbr.rel (0) target = $region37
    $region36: #{tpu_custom_call.1} parent=1 // pred_region
      %s320 = ssub.s32 128, 128
      %321 = vsyncadd [#allocation4], %s320
      %s323 = sshll.u32 [#allocation10], 4
      %s324 = int_to_ptr.vmem [resolvable:$true] %s323
      %326 = dma.vmem_to_hbm [thread:$0]  %s324, 128, %s4, [#allocation4]
    $region37: #{tpu_custom_call.1} parent=1 // pred_fallthru
      _
    // Predicated region
    $region38: #{tpu_custom_call.1} parent=1 // pred_check
      _
    $region39: #{tpu_custom_call.1} parent=1 // pred_check_branch
      %328 = sbr.rel (0) target = $region41
    $region40: #{tpu_custom_call.1} parent=1 // pred_region
      %329 = dma.done [#allocation4], 128
    $region41: #{tpu_custom_call.1} parent=1 // pred_fallthru
      _
    %330 = vsyncpa [#allocation3], 1
    %331 = vsyncpa [#allocation6], 1
    %332 = vsyncpa [#allocation9], 1
    %333 = vsyncpa [#allocation4], 1

</llo_original>
